<compile_context>
chip_gen: v7x
topology: tpu7x:2x2x1
jax: 0.10.0
libtpu: 0.0.40
codegen_flags: <defaults>
</compile_context>

<pallas_src>
import jax
import jax.numpy as jnp
from jax.experimental import pallas as pl
from jax.experimental.pallas import tpu as pltpu


def _cdiv(a, b):
    return -(-a // b)


def _round_up(x, m):
    return ((x + m - 1) // m) * m


def _make_conv1x1_kernel(nb):
    """Kernel over a (nb, C_in, TM) activation block; statically unrolled over nb."""

    def kernel(x_ref, w_ref, b_ref, o_ref):
        # x_ref: (nb, C_in, TM)   activation tile (lane-dense along spatial axis)
        # w_ref: (C_out, C_in)    resident weight
        # b_ref: (C_out, 1)       resident bias
        # o_ref: (nb, C_out, TM)  lane-dense output tile
        w = w_ref[...]
        bvec = b_ref[...].astype(jnp.float32)
        for b in range(nb):  # nb is small & static -> fully unrolled
            acc = jnp.dot(w, x_ref[b], preferred_element_type=jnp.float32)
            o_ref[b] = (acc + bvec).astype(o_ref.dtype)

    kernel.__name__ = f"conv1x1_nb{nb}"
    return kernel


def _tpu_tuning():
    """Return (vmem_budget, vmem_limit, target_step_bytes, prefer_even_grid)."""
    vmem_cap = 128 << 20
    try:
        info = pltpu.get_tpu_info()
        cap = getattr(info, "vmem_capacity_bytes", None)
        if cap:
            vmem_cap = int(cap)
    except Exception:
        pass
    kind = ""
    try:
        kind = jax.devices()[0].device_kind.lower()
    except Exception:
        pass

    is_v7x_like = vmem_cap <= (64 << 20)  # v7x: 64 MiB VMEM per TensorCore
    is_v5e_like = ("v5 lite" in kind) or ("v5e" in kind) or ("v5litepod" in kind)

    if is_v7x_like:
        # ~3.2 TB/s HBM: need ~2.5x the per-step bytes of a v6e tile to stay on
        # the roofline, but only 64 MiB VMEM -> tighter live-byte budget.
        vmem_budget = min(int(vmem_cap * 0.6), 40 << 20)
        vmem_limit = min(int(vmem_cap * 0.75), 48 << 20)
        target_step_bytes = 16 << 20
        prefer_even_grid = True  # 2 TensorCores/chip
    elif is_v5e_like:
        # ~0.82 TB/s HBM: ~4 MiB/step already saturates; don't burn VMEM.
        vmem_budget = 48 << 20
        vmem_limit = 64 << 20
        target_step_bytes = 4 << 20
        prefer_even_grid = False
    else:
        # v6e-class (128 MiB VMEM, ~1.4 TB/s HBM).
        vmem_budget = 64 << 20
        vmem_limit = 96 << 20
        target_step_bytes = 8 << 20
        prefer_even_grid = False
    return vmem_budget, vmem_limit, target_step_bytes, prefer_even_grid


def _choose_tiling(N, M, C_in, C_out, in_isz, out_isz,
                   vmem_budget, target_step_bytes, prefer_even_grid,
                   nb_max=16):
    """Pick (nb, tm, grid_n, grid_m) for grid=(grid_n, grid_m), block (nb,C,tm)."""
    col_bytes = C_in * in_isz + C_out * out_isz  # HBM bytes per spatial column

    def live_bytes(nb, tm):
        x_buf = 2 * nb * C_in * tm * in_isz            # double-buffered input
        o_buf = 2 * nb * C_out * tm * out_isz          # double-buffered output
        acc = 4 * nb * C_out * tm                      # f32 matmul/bias temp
        wb = 2 * (C_in * C_out * in_isz + C_out * 4)   # resident weight/bias
        return x_buf + o_buf + acc + wb

    # Spatial tile: largest multiple of 128 that (a) fits the VMEM budget and
    # (b) is no bigger than needed to hit the per-step HBM-byte target.
    per_tm = 2 * C_in * in_isz + 2 * C_out * out_isz + 4 * C_out
    const = 2 * (C_in * C_out * in_isz + C_out * 4)
    tm_cap = max(((max(vmem_budget - const, 0) // per_tm) // 128) * 128, 128)
    tm_target = max(_round_up(_cdiv(target_step_bytes, col_bytes), 128), 128)
    tm = min(tm_target, tm_cap)

    if tm >= M:
        tm = M  # full-extent block (legal even when M is not a multiple of 128)
        grid_m = 1
    else:
        grid_m = _cdiv(M, tm)
        tm = _round_up(_cdiv(M, grid_m), 128)  # rebalance: no near-empty tail
        grid_m = _cdiv(M, tm)

    # Batch blocking for the small-M / large-N regime.
    nb = 1
    if grid_m == 1 and N > 1:
        step_bytes = col_bytes * tm
        if step_bytes < target_step_bytes:
            nb = max(1, min(nb_max, N, target_step_bytes // max(step_bytes, 1)))
            while nb > 1 and live_bytes(nb, tm) > vmem_budget:
                nb -= 1
            nb = _cdiv(N, _cdiv(N, nb))  # balance batch blocks
    grid_n = _cdiv(N, nb)

    # Megacore (v7x): make sure both TensorCores get work.
    if prefer_even_grid:
        total = grid_n * grid_m
        if total == 1:
            if N >= 2:
                nb = _cdiv(N, 2)
                grid_n = _cdiv(N, nb)
            elif M >= 256:
                tm = _round_up(_cdiv(M, 2), 128)
                grid_m = _cdiv(M, tm)
        elif total % 2 == 1 and grid_m % 2 == 1 and M >= 128 * (grid_m + 1):
            grid_m += 1
            tm = _round_up(_cdiv(M, grid_m), 128)
            grid_m = _cdiv(M, tm)

    return nb, tm, grid_n, grid_m


def outconv_forward(x_nchw, weight, bias, *, tuning=None):
    """1x1 conv: x (N, C_in, H, W), weight (C_out, C_in, 1, 1), bias (C_out,)."""
    N, C_in, H, W = x_nchw.shape
    C_out = weight.shape[0]
    M = H * W

    # Free reshapes only — no NCHW<->NHWC transposes.
    x_flat = x_nchw.reshape(N, C_in, M)
    # Weight runs in the activation dtype (standard mixed precision for bf16
    # activations); the matmul below always accumulates in f32.
    w_mat = weight.reshape(C_out, C_in).astype(x_nchw.dtype)
    b_mat = bias.reshape(C_out, 1)

    in_isz = jnp.dtype(x_nchw.dtype).itemsize
    out_isz = in_isz

    if tuning is None:
        tuning = _tpu_tuning()
    vmem_budget, vmem_limit, target_step_bytes, prefer_even = tuning

    nb, tm, grid_n, grid_m = _choose_tiling(
        N, M, C_in, C_out, in_isz, out_isz,
        vmem_budget, target_step_bytes, prefer_even)

    cost = pl.CostEstimate(
        flops=2 * N * M * C_in * C_out,
        transcendentals=0,
        bytes_accessed=(in_isz * (N * M * C_in + C_in * C_out)
                        + out_isz * N * M * C_out + 4 * C_out),
    )

    out_flat = pl.pallas_call(
        _make_conv1x1_kernel(nb),
        out_shape=jax.ShapeDtypeStruct((N, C_out, M), x_nchw.dtype),
        grid_spec=pltpu.PrefetchScalarGridSpec(
            num_scalar_prefetch=0,
            grid=(grid_n, grid_m),
            in_specs=[
                pl.BlockSpec((nb, C_in, tm), lambda n, m: (n, 0, m)),
                pl.BlockSpec((C_out, C_in), lambda n, m: (0, 0)),
                pl.BlockSpec((C_out, 1), lambda n, m: (0, 0)),
            ],
            out_specs=pl.BlockSpec((nb, C_out, tm), lambda n, m: (n, 0, m)),
        ),
        compiler_params=pltpu.CompilerParams(
            dimension_semantics=("parallel", "parallel"),
            vmem_limit_bytes=vmem_limit,
        ),
        cost_estimate=cost,
    )(x_flat, w_mat, b_mat)

    return out_flat.reshape(N, C_out, H, W)


def _torch_style_conv_params(key, c_in, c_out, dtype=jnp.float32):
    """Deterministic PyTorch-style uniform init for a 1x1 Conv2d."""
    k_w, k_b = jax.random.split(key)
    fan_in = c_in * 1 * 1
    bound = 1.0 / (fan_in ** 0.5)
    weight = jax.random.uniform(k_w, (c_out, c_in, 1, 1), dtype,
                                minval=-bound, maxval=bound)
    bias = jax.random.uniform(k_b, (c_out,), dtype, minval=-bound, maxval=bound)
    return weight, bias


def _reference(x, weight, bias):
    c_out, c_in = weight.shape[0], weight.shape[1]
    return (jnp.einsum("nchw,oc->nohw", x, weight.reshape(c_out, c_in))
            + bias[None, :, None, None])


if __name__ == "__main__":
    key = jax.random.PRNGKey(0)
    k1, k2, k3, k4 = jax.random.split(key, 4)

    # --- Primary demo: module-consistent small shapes (exercises the batched,
    #     single-spatial-tile path on v5e/v6e and the even-grid path on v7x).
    N, C_in, C_out, H, W = 2, 4, 4, 16, 16
    x = jax.random.normal(k1, (N, C_in, H, W), dtype=jnp.float32)
    weight, bias = _torch_style_conv_params(k2, C_in, C_out)

    out = outconv_forward(x, weight, bias)
    out = jax.block_until_ready(out)
    ref = _reference(x, weight, bias)
    assert out.shape == (N, C_out, H, W)
    assert jnp.allclose(out, ref, atol=1e-5), "mismatch vs reference (primary)"

    # --- Secondary check: force a tiny per-step byte target to exercise the
    #     spatial-tiled path with a ragged final tile (M=400, tm=128, grid_m=4).
    N2, C_in2, C_out2, H2, W2 = 3, 8, 4, 20, 20
    x2 = jax.random.normal(k3, (N2, C_in2, H2, W2), dtype=jnp.float32)
    weight2, bias2 = _torch_style_conv_params(k4, C_in2, C_out2)

    out2 = outconv_forward(x2, weight2, bias2,
                           tuning=(48 << 20, 64 << 20, 1, False))
    out2 = jax.block_until_ready(out2)
    ref2 = _reference(x2, weight2, bias2)
    assert out2.shape == (N2, C_out2, H2, W2)
    assert jnp.allclose(out2, ref2, atol=1e-5), "mismatch vs reference (tiled)"

    print("KERNEL_OK")
</pallas_src>

<mosaic_0001>
module attributes {stable_mosaic.version = 11 : i64} {
  func.func @conv1x1_nb2(%arg0: i32, %arg1: i32, %arg2: memref<2x4x256xf32, #tpu.memory_space<vmem>>, %arg3: memref<4x4xf32, #tpu.memory_space<vmem>>, %arg4: memref<4x1xf32, #tpu.memory_space<vmem>>, %arg5: memref<2x4x256xf32, #tpu.memory_space<vmem>>) attributes {dimension_semantics = [#tpu.dimension_semantics<parallel>, #tpu.dimension_semantics<parallel>], iteration_bounds = array<i64: 1, 1>, scalar_prefetch = 0 : i64, scratch_operands = 0 : i64, tpu.core_type = #tpu.core_type<tc>, window_params = [{transform_indices = @transform_0, window_bounds = array<i64: 2, 4, 256>}, {pipeline_mode = #tpu.pipeline_mode<synchronous>, transform_indices = @transform_1, window_bounds = array<i64: 4, 4>}, {pipeline_mode = #tpu.pipeline_mode<synchronous>, transform_indices = @transform_2, window_bounds = array<i64: 4, 1>}, {transform_indices = @transform_3, window_bounds = array<i64: 2, 4, 256>}]} {
    %c0 = arith.constant 0 : index
    %c0_0 = arith.constant 0 : index
    %0 = vector.load %arg3[%c0, %c0_0] : memref<4x4xf32, #tpu.memory_space<vmem>>, vector<4x4xf32>
    %c0_1 = arith.constant 0 : index
    %c0_2 = arith.constant 0 : index
    %1 = vector.load %arg4[%c0_1, %c0_2] : memref<4x1xf32, #tpu.memory_space<vmem>>, vector<4x1xf32>
    %c0_3 = arith.constant 0 : index
    %c0_4 = arith.constant 0 : index
    %c0_5 = arith.constant 0 : index
    %2 = vector.load %arg2[%c0_3, %c0_4, %c0_5] : memref<2x4x256xf32, #tpu.memory_space<vmem>>, vector<1x4x256xf32>
    %3 = vector.shape_cast %2 : vector<1x4x256xf32> to vector<4x256xf32>
    %cst = arith.constant dense<0.000000e+00> : vector<4x256xf32>
    %4 = tpu.matmul %0, %3, %cst {dimension_numbers = #tpu.dot_dimension_numbers<[1], [0], [0], [1], [0, 0, 1, 1], [], []>} : vector<4x4xf32>, vector<4x256xf32>, vector<4x256xf32> -> vector<4x256xf32>
    %5 = vector.broadcast %1 : vector<4x1xf32> to vector<4x256xf32>
    %6 = arith.addf %4, %5 : vector<4x256xf32>
    %c0_6 = arith.constant 0 : index
    %c0_7 = arith.constant 0 : index
    %c0_8 = arith.constant 0 : index
    %7 = vector.load %arg5[%c0_6, %c0_7, %c0_8] : memref<2x4x256xf32, #tpu.memory_space<vmem>>, vector<1x4x256xf32>
    %8 = vector.shape_cast %7 : vector<1x4x256xf32> to vector<4x256xf32>
    %9 = vector.shape_cast %6 : vector<4x256xf32> to vector<1x4x256xf32>
    tpu.vector_store %arg5[%c0_6, %c0_7, %c0_8], %9 {strides = array<i32>} : memref<2x4x256xf32, #tpu.memory_space<vmem>>, vector<1x4x256xf32>,
    %c1 = arith.constant 1 : index
    %c0_9 = arith.constant 0 : index
    %c0_10 = arith.constant 0 : index
    %10 = vector.load %arg2[%c1, %c0_9, %c0_10] : memref<2x4x256xf32, #tpu.memory_space<vmem>>, vector<1x4x256xf32>
    %11 = vector.shape_cast %10 : vector<1x4x256xf32> to vector<4x256xf32>
    %cst_11 = arith.constant dense<0.000000e+00> : vector<4x256xf32>
    %12 = tpu.matmul %0, %11, %cst_11 {dimension_numbers = #tpu.dot_dimension_numbers<[1], [0], [0], [1], [0, 0, 1, 1], [], []>} : vector<4x4xf32>, vector<4x256xf32>, vector<4x256xf32> -> vector<4x256xf32>
    %13 = vector.broadcast %1 : vector<4x1xf32> to vector<4x256xf32>
    %14 = arith.addf %12, %13 : vector<4x256xf32>
    %c1_12 = arith.constant 1 : index
    %c0_13 = arith.constant 0 : index
    %c0_14 = arith.constant 0 : index
    %15 = vector.load %arg5[%c1_12, %c0_13, %c0_14] : memref<2x4x256xf32, #tpu.memory_space<vmem>>, vector<1x4x256xf32>
    %16 = vector.shape_cast %15 : vector<1x4x256xf32> to vector<4x256xf32>
    %17 = vector.shape_cast %14 : vector<4x256xf32> to vector<1x4x256xf32>
    tpu.vector_store %arg5[%c1_12, %c0_13, %c0_14], %17 {strides = array<i32>} : memref<2x4x256xf32, #tpu.memory_space<vmem>>, vector<1x4x256xf32>,
    return
  }
  func.func @transform_0(%arg0: i32, %arg1: i32) -> (i32, i32, i32) {
    %c0_i32 = arith.constant 0 : i32
    %c0_i32_0 = arith.constant 0 : i32
    return %arg0, %c0_i32, %arg1 : i32, i32, i32
  }
  func.func @transform_1(%arg0: i32, %arg1: i32) -> (i32, i32) {
    %c0_i32 = arith.constant 0 : i32
    %c0_i32_0 = arith.constant 0 : i32
    %c0_i32_1 = arith.constant 0 : i32
    return %c0_i32, %c0_i32_0 : i32, i32
  }
  func.func @transform_2(%arg0: i32, %arg1: i32) -> (i32, i32) {
    %c0_i32 = arith.constant 0 : i32
    %c0_i32_0 = arith.constant 0 : i32
    %c0_i32_1 = arith.constant 0 : i32
    return %c0_i32, %c0_i32_0 : i32, i32
  }
  func.func @transform_3(%arg0: i32, %arg1: i32) -> (i32, i32, i32) {
    %c0_i32 = arith.constant 0 : i32
    %c0_i32_0 = arith.constant 0 : i32
    return %arg0, %c0_i32, %arg1 : i32, i32, i32
  }
}

</mosaic_0001>

<llo_original>
// kernel: tpu_custom_call.1
$region0: #{tpu_custom_call.1}
  #allocation0 [shape = 'u32[]', space=smem, size = 0x4, offset = 0x4, fixed_abs, tag = 'smem constant byte address 0x4 - core index']
  #allocation1 [shape = 'u32[144,128]{1,0:T(1,128)}', space=vmem, size = 0x12000, scoped, tag = 'internal scratch']
  %s0 = inlined_call_operand.hbm [shape: f32[2,4,256], index: 0, kind: input, shape index: {}]
  %s1 = inlined_call_operand.hbm [shape: f32[4,4], index: 1, kind: input, shape index: {}]
  %s2 = inlined_call_operand.hbm [shape: f32[4,1], index: 2, kind: input, shape index: {}]
  %s3 = inlined_call_operand.hbm [shape: f32[2,4,256], index: 3, kind: output, shape index: {}]
  %s4 = sld [smem:[#allocation0]]
  $region34: #{tpu_custom_call.1} parent=0
    _
  %s6 = ssub.s32 1, %s4
  %s7 = scalar_select 0, %s6, %s4
  $region1: #{tpu_custom_call.1} parent=0
    #allocation2 [shape = 'u8[8192]{0}', space=vmem, size = 0x2000, scoped, tag = 'input window, operand 0, single buffered']
    #allocation3 [shape = 's32[1]{0}', space=sflag, size = 0x4, scoped, tag = 'scoped memory for tpu_custom_call.1']
    #allocation4 [shape = 's32[1]{0}', space=sflag, size = 0x4, scoped, tag = 'scoped memory for tpu_custom_call.1']
    #allocation5 [shape = 'u8[2048]{0}', space=vmem, size = 0x800, scoped, tag = 'input window, operand 1, single buffered']
    #allocation6 [shape = 's32[1]{0}', space=sflag, size = 0x4, scoped, tag = 'scoped memory for tpu_custom_call.1']
    #allocation7 [shape = 'u8[2048]{0}', space=vmem, size = 0x800, scoped, tag = 'input window, operand 2, single buffered']
    #allocation8 [shape = 'u8[8192]{0}', space=vmem, size = 0x2000, scoped, tag = 'output window, operand 0, single buffered']
    %8 = vsyncpa [#allocation3], 0
    %9 = vsyncpa [#allocation6], 0
    %10 = vsyncpa [#allocation4], 0
    // Predicated region
    $region2: #{tpu_custom_call.1} parent=1 // pred_check
      _
    $region3: #{tpu_custom_call.1} parent=1 // pred_check_branch
      %12 = sbr.rel (0) target = $region5
    $region4: #{tpu_custom_call.1} parent=1 // pred_region
      %s14 = ssub.s32 256, 256
      %15 = vsyncadd [#allocation3], %s14
      %s16 = sshll.u32 [#allocation2], 4
      %s17 = int_to_ptr.vmem [resolvable:$true] %s16
      %22 = dma.hbm_to_vmem [thread:$0]  %s0, 256, %s17, [#allocation3], 128, 128, 8
    $region5: #{tpu_custom_call.1} parent=1 // pred_fallthru
      _
    // Predicated region
    $region6: #{tpu_custom_call.1} parent=1 // pred_check
      _
    $region7: #{tpu_custom_call.1} parent=1 // pred_check_branch
      %24 = sbr.rel (0) target = $region9
    $region8: #{tpu_custom_call.1} parent=1 // pred_region
      %s26 = ssub.s32 64, 64
      %27 = vsyncadd [#allocation6], %s26
      %s29 = sshll.u32 [#allocation5], 4
      %s30 = int_to_ptr.vmem [resolvable:$true] %s29
      %32 = dma.hbm_to_vmem [thread:$0]  %s1, 64, %s30, [#allocation6]
    $region9: #{tpu_custom_call.1} parent=1 // pred_fallthru
      _
    // Predicated region
    $region10: #{tpu_custom_call.1} parent=1 // pred_check
      _
    $region11: #{tpu_custom_call.1} parent=1 // pred_check_branch
      %34 = sbr.rel (0) target = $region13
    $region12: #{tpu_custom_call.1} parent=1 // pred_region
      %s36 = ssub.s32 64, 64
      %37 = vsyncadd [#allocation6], %s36
      %s39 = sshll.u32 [#allocation7], 4
      %s40 = int_to_ptr.vmem [resolvable:$true] %s39
      %42 = dma.hbm_to_vmem [thread:$0]  %s2, 64, %s40, [#allocation6]
    $region13: #{tpu_custom_call.1} parent=1 // pred_fallthru
      _
    // Predicated region
    $region14: #{tpu_custom_call.1} parent=1 // pred_check
      _
    $region15: #{tpu_custom_call.1} parent=1 // pred_check_branch
      %44 = sbr.rel (0) target = $region17
    $region16: #{tpu_custom_call.1} parent=1 // pred_region
      %45 = dma.done [#allocation3], 256
    $region17: #{tpu_custom_call.1} parent=1 // pred_fallthru
      _
    // Predicated region
    $region18: #{tpu_custom_call.1} parent=1 // pred_check
      _
    $region19: #{tpu_custom_call.1} parent=1 // pred_check_branch
      %47 = sbr.rel (0) target = $region21
    $region20: #{tpu_custom_call.1} parent=1 // pred_region
      %48 = dma.done [#allocation6], 64
    $region21: #{tpu_custom_call.1} parent=1 // pred_fallthru
      _
    // Predicated region
    $region22: #{tpu_custom_call.1} parent=1 // pred_check
      _
    $region23: #{tpu_custom_call.1} parent=1 // pred_check_branch
      %50 = sbr.rel (0) target = $region25
    $region24: #{tpu_custom_call.1} parent=1 // pred_region
      %51 = dma.done [#allocation6], 64
    $region25: #{tpu_custom_call.1} parent=1 // pred_fallthru
      _
    %v52 = vld [vmem:[#allocation5] sm:$0xf]
    %v53 = vld [vmem:[#allocation7] sm:$0xf]
    %v54 = vld [vmem:[#allocation2] sm:$0xff]
    %56 = vset.pattern.permute.xlu0 0
    %57 = vperm.xlu0 %56, %v53
    %v58 = vpop.permute.xlu0 %57
    %v61 = vcombine.high %v54, %v54
    %vm62 = vcmask 31744
    %v64 = vsel %vm62, %v52, 0
    %vm66 = vcmask 1043456
    %v67 = vsel %vm66, %v54, 0
    %v69 = vsel %vm66, %v61, 0
    %71 = vmatprep.subr.mxu0 %v69
    %72 = vmatpush1.msra.mxu0 %v67
    %73 = vmatprep.subr.mxu0 0.0
    %74 = vmatpush1.msra.mxu0 0.0
    %75 = vmatprep.subr.mxu0 0.0
    %76 = vmatpush1.msra.mxu0 0.0
    %77 = vmatprep.subr.mxu0 0.0
    %78 = vmatpush1.msra.mxu0 0.0
    %79 = vmatprep.subr.mxu0 0.0
    %80 = vmatpush1.msra.mxu0 0.0
    %81 = vmatprep.subr.mxu0 0.0
    %82 = vmatpush1.msra.mxu0 0.0
    %83 = vmatprep.subr.mxu0 0.0
    %84 = vmatpush1.msra.mxu0 0.0
    %85 = vmatprep.subr.mxu0 0.0
    %86 = vmatpush1.msra.mxu0 0.0
    %87 = vmatprep.subr.mxu0 0.0
    %88 = vmatpush1.msra.mxu0 0.0
    %89 = vmatprep.subr.mxu0 0.0
    %90 = vmatpush1.msra.mxu0 0.0
    %91 = vmatprep.subr.mxu0 0.0
    %92 = vmatpush1.msra.mxu0 0.0
    %93 = vmatprep.subr.mxu0 0.0
    %94 = vmatpush1.msra.mxu0 0.0
    %95 = vmatprep.subr.mxu0 0.0
    %96 = vmatpush1.msra.mxu0 0.0
    %97 = vmatprep.subr.mxu0 0.0
    %98 = vmatpush1.msra.mxu0 0.0
    %99 = vmatprep.subr.mxu0 0.0
    %100 = vmatpush1.msra.mxu0 0.0
    %101 = vmatprep.subr.mxu0 0.0
    %102 = vmatpush1.msra.mxu0 0.0
    %103 = vmatprep.subr.mxu0 0.0
    %104 = vmatpush1.msra.mxu0 0.0
    %105 = vmatprep.subr.mxu0 0.0
    %106 = vmatpush1.msra.mxu0 0.0
    %107 = vmatprep.subr.mxu0 0.0
    %108 = vmatpush1.msra.mxu0 0.0
    %109 = vmatprep.subr.mxu0 0.0
    %110 = vmatpush1.msra.mxu0 0.0
    %111 = vmatprep.subr.mxu0 0.0
    %112 = vmatpush1.msra.mxu0 0.0
    %113 = vmatprep.subr.mxu0 0.0
    %114 = vmatpush1.msra.mxu0 0.0
    %115 = vmatprep.subr.mxu0 0.0
    %116 = vmatpush1.msra.mxu0 0.0
    %117 = vmatprep.subr.mxu0 0.0
    %118 = vmatpush1.msra.mxu0 0.0
    %119 = vmatprep.subr.mxu0 0.0
    %120 = vmatpush1.msra.mxu0 0.0
    %121 = vmatprep.subr.mxu0 0.0
    %122 = vmatpush1.msra.mxu0 0.0
    %123 = vmatprep.subr.mxu0 0.0
    %124 = vmatpush1.msra.mxu0 0.0
    %125 = vmatprep.subr.mxu0 0.0
    %126 = vmatpush1.msra.mxu0 0.0
    %127 = vmatprep.subr.mxu0 0.0
    %128 = vmatpush1.msra.mxu0 0.0
    %129 = vmatprep.subr.mxu0 0.0
    %130 = vmatpush1.msra.mxu0 0.0
    %131 = vmatprep.subr.mxu0 0.0
    %132 = vmatpush1.msra.mxu0 0.0
    %133 = vmatprep.subr.mxu0 0.0
    %134 = vmatpush1.msra.mxu0 0.0
    %135 = vmatprep.mubr.f32.mxu0 0.0
    %136 = vmatmul.mubr.f32.gmra.mrb[0].mxu0 %v64
    %v137 = vpop.f32.mrb[0].mxu0
    %v138 = vadd.f32 %v58, %v137
    %v139 = vpop.f32.mrb[0].mxu0
    %v140 = vadd.f32 %v58, %v139
    %141 = vdwg.mxu0
    %v144 = vcombine.low %v138, %v140
    %146 = vst [vmem:[#allocation8] sm:$0xff] %v144
    %s147 = scalar_lea.vmem [#allocation2], 8
    %v148 = vld [vmem:[%s147] sm:$0xff]
    %v150 = vcombine.high %v148, %v148
    %v151 = vsel %vm66, %v148, 0
    %v153 = vsel %vm66, %v150, 0
    %155 = vmatprep.subr.mxu0 %v153
    %156 = vmatpush1.msra.mxu0 %v151
    %157 = vmatprep.subr.mxu0 0.0
    %158 = vmatpush1.msra.mxu0 0.0
    %159 = vmatprep.subr.mxu0 0.0
    %160 = vmatpush1.msra.mxu0 0.0
    %161 = vmatprep.subr.mxu0 0.0
    %162 = vmatpush1.msra.mxu0 0.0
    %163 = vmatprep.subr.mxu0 0.0
    %164 = vmatpush1.msra.mxu0 0.0
    %165 = vmatprep.subr.mxu0 0.0
    %166 = vmatpush1.msra.mxu0 0.0
    %167 = vmatprep.subr.mxu0 0.0
    %168 = vmatpush1.msra.mxu0 0.0
    %169 = vmatprep.subr.mxu0 0.0
    %170 = vmatpush1.msra.mxu0 0.0
    %171 = vmatprep.subr.mxu0 0.0
    %172 = vmatpush1.msra.mxu0 0.0
    %173 = vmatprep.subr.mxu0 0.0
    %174 = vmatpush1.msra.mxu0 0.0
    %175 = vmatprep.subr.mxu0 0.0
    %176 = vmatpush1.msra.mxu0 0.0
    %177 = vmatprep.subr.mxu0 0.0
    %178 = vmatpush1.msra.mxu0 0.0
    %179 = vmatprep.subr.mxu0 0.0
    %180 = vmatpush1.msra.mxu0 0.0
    %181 = vmatprep.subr.mxu0 0.0
    %182 = vmatpush1.msra.mxu0 0.0
    %183 = vmatprep.subr.mxu0 0.0
    %184 = vmatpush1.msra.mxu0 0.0
    %185 = vmatprep.subr.mxu0 0.0
    %186 = vmatpush1.msra.mxu0 0.0
    %187 = vmatprep.subr.mxu0 0.0
    %188 = vmatpush1.msra.mxu0 0.0
    %189 = vmatprep.subr.mxu0 0.0
    %190 = vmatpush1.msra.mxu0 0.0
    %191 = vmatprep.subr.mxu0 0.0
    %192 = vmatpush1.msra.mxu0 0.0
    %193 = vmatprep.subr.mxu0 0.0
    %194 = vmatpush1.msra.mxu0 0.0
    %195 = vmatprep.subr.mxu0 0.0
    %196 = vmatpush1.msra.mxu0 0.0
    %197 = vmatprep.subr.mxu0 0.0
    %198 = vmatpush1.msra.mxu0 0.0
    %199 = vmatprep.subr.mxu0 0.0
    %200 = vmatpush1.msra.mxu0 0.0
    %201 = vmatprep.subr.mxu0 0.0
    %202 = vmatpush1.msra.mxu0 0.0
    %203 = vmatprep.subr.mxu0 0.0
    %204 = vmatpush1.msra.mxu0 0.0
    %205 = vmatprep.subr.mxu0 0.0
    %206 = vmatpush1.msra.mxu0 0.0
    %207 = vmatprep.subr.mxu0 0.0
    %208 = vmatpush1.msra.mxu0 0.0
    %209 = vmatprep.subr.mxu0 0.0
    %210 = vmatpush1.msra.mxu0 0.0
    %211 = vmatprep.subr.mxu0 0.0
    %212 = vmatpush1.msra.mxu0 0.0
    %213 = vmatprep.subr.mxu0 0.0
    %214 = vmatpush1.msra.mxu0 0.0
    %215 = vmatprep.subr.mxu0 0.0
    %216 = vmatpush1.msra.mxu0 0.0
    %217 = vmatprep.subr.mxu0 0.0
    %218 = vmatpush1.msra.mxu0 0.0
    %219 = vmatprep.mubr.f32.mxu0 0.0
    %220 = vmatmul.mubr.f32.gmra.mrb[0].mxu0 %v64
    %v221 = vpop.f32.mrb[0].mxu0
    %v222 = vadd.f32 %v58, %v221
    %v223 = vpop.f32.mrb[0].mxu0
    %v224 = vadd.f32 %v58, %v223
    %225 = vdwg.mxu0
    %v228 = vcombine.low %v222, %v224
    %s230 = scalar_lea.vmem [#allocation8], 8
    %231 = vst [vmem:[%s230] sm:$0xff] %v228
    // Predicated region
    $region26: #{tpu_custom_call.1} parent=1 // pred_check
      _
    $region27: #{tpu_custom_call.1} parent=1 // pred_check_branch
      %233 = sbr.rel (0) target = $region29
    $region28: #{tpu_custom_call.1} parent=1 // pred_region
      %s235 = ssub.s32 256, 256
      %236 = vsyncadd [#allocation4], %s235
      %s237 = sshll.u32 [#allocation8], 4
      %s238 = int_to_ptr.vmem [resolvable:$true] %s237
      %243 = dma.vmem_to_hbm [thread:$0]  %s238, 256, %s3, [#allocation4], 128, 128, 8
    $region29: #{tpu_custom_call.1} parent=1 // pred_fallthru
      _
    // Predicated region
    $region30: #{tpu_custom_call.1} parent=1 // pred_check
      _
    $region31: #{tpu_custom_call.1} parent=1 // pred_check_branch
      %245 = sbr.rel (0) target = $region33
    $region32: #{tpu_custom_call.1} parent=1 // pred_region
      %246 = dma.done [#allocation4], 256
    $region33: #{tpu_custom_call.1} parent=1 // pred_fallthru
      _
    %247 = vsyncpa [#allocation3], 1
    %248 = vsyncpa [#allocation6], 1
    %249 = vsyncpa [#allocation4], 1

</llo_original>
